<compile_context>
chip_gen: v7x
topology: tpu7x:2x2x1
jax: 0.10.0
libtpu: 0.0.40
codegen_flags: <defaults>
</compile_context>

<pallas_src>
import functools

import jax
import jax.numpy as jnp
import numpy as np
from jax import lax
from jax.experimental import pallas as pl
from jax.experimental.pallas import tpu as pltpu


# ----------------------------------------------------------------------------
# Pallas kernel: one batch element per grid step.  No loops, no relayouts.
# ----------------------------------------------------------------------------
def _upsampling_bottleneck_kernel(
    x_ref,      # (1, H, W*Cin)          f32  lane-dense input block
    idx_ref,    # (1, H, W*Cout)         i32  flat max-pool indices, cols [w, c]
    wproj_ref,  # (W*Cin, WIDE + W*Cmid) f32  fused main+ext projection (BN scale folded)
    bproj_ref,  # (1, WIDE + W*Cmid)     f32  fused BN shifts
    wt4_ref,    # (W*Cmid, TCOL)         f32  fused 2x2/s2 tconv, all 4 sub-positions
    bt4_ref,    # (1, TCOL)
    we2_ref,    # (TCOL, WIDE)           f32  block-diagonal expansion 1x1 conv
    b24_ref,    # (1, WIDE)
    r_ref,      # (W*Cout, WIDE)         f32  0/1 replication matrix [w,c] -> [dy,w,dx,c]
    tcol_ref,   # (1, WIDE)              f32  per-column target offset dy*2W + 2w + dx
    out_ref,    # (1, H, WIDE)           f32  WIDE = 4*W*Cout, cols [dy, w, dx, c]
    *, W,
):
    H = x_ref.shape[1]
    WIDE = out_ref.shape[2]
    WCout = idx_ref.shape[2]

    x = x_ref[0]                                    # (H, W*Cin)

    # Fused main + ext 1x1 projections: one MXU push.  BN scales are already
    # folded into the weight columns; only the shift-add remains here.
    proj = jnp.dot(x, wproj_ref[...],
                   preferred_element_type=jnp.float32) + bproj_ref[...]
    main4 = proj[:, :WIDE]                          # main branch, replicated over (dy, dx)
    ext1 = jnp.maximum(proj[:, WIDE:], 0.0)         # (H, W*Cmid), ReLU

    # 2x2 / stride-2 transposed conv for all four output sub-positions in a
    # single matmul, then one BN shift + ReLU.
    t4 = jnp.maximum(
        jnp.dot(ext1, wt4_ref[...],
                preferred_element_type=jnp.float32) + bt4_ref[...],
        0.0)                                        # (H, TCOL) cols [dy, w, dx, cm]

    # Expansion 1x1 conv as one block-diagonal matmul over the 4*W (dy, w, dx)
    # groups.  Dropout2d(p=0) is the identity.
    e4 = jnp.dot(t4, we2_ref[...],
                 preferred_element_type=jnp.float32) + b24_ref[...]

    # Max-unpool: subtract the per-row base (4*W*row) from the stored flat
    # indices in the compact [w, c] domain (one int iota, no div/mod), then
    # replicate into the [dy, w, dx, c] column layout via the 0/1 matrix R
    # (exact for these small integers) and compare against the precomputed
    # per-column offset dy*2W + 2w + dx.
    row = lax.broadcasted_iota(jnp.int32, (H, WCout), 0)
    idx_rel = (idx_ref[0] - (4 * W) * row).astype(jnp.float32)
    idx4 = jnp.dot(idx_rel, r_ref[...],
                   preferred_element_type=jnp.float32)        # (H, WIDE)
    main_up = jnp.where(jnp.abs(idx4 - tcol_ref[...]) < 0.5, main4, 0.0)

    # Single dense (8, 256) store: lane-dense output block.
    out_ref[0] = jnp.maximum(main_up + e4, 0.0)


# ----------------------------------------------------------------------------
# One-time host-side weight fusion (BN scales folded in, layouts baked in).
# ----------------------------------------------------------------------------
def fuse_params(p, H, W):
    Cin, Cout = p["wm"].shape
    Cmid = p["we1"].shape[1]

    sm = np.asarray(p["sm"]).reshape(Cout)
    bm = np.asarray(p["bm"]).reshape(Cout)
    s1 = np.asarray(p["s1"]).reshape(Cmid)
    b1 = np.asarray(p["b1"]).reshape(Cmid)
    st = np.asarray(p["st"]).reshape(Cmid)
    bt = np.asarray(p["bt"]).reshape(Cmid)
    s2 = np.asarray(p["s2"]).reshape(Cout)
    b2 = np.asarray(p["b2"]).reshape(Cout)

    wm_s = np.asarray(p["wm"]) * sm[None, :]                    # (Cin, Cout)
    we1_s = np.asarray(p["we1"]) * s1[None, :]                  # (Cin, Cmid)
    wt_s = np.asarray(p["wt"]) * st[None, None, None, :]        # (2,2,Cmid,Cmid)
    we2_s = np.asarray(p["we2"]) * s2[None, :]                  # (Cmid, Cout)

    WIDE = 4 * W * Cout        # output columns, ordered [dy, w, dx, c]
    TCOL = 4 * W * Cmid        # tconv columns,  ordered [dy, w, dx, cm]
    EXT = W * Cmid

    def jcol(dy, w, dx):   # first column of the Cout group at (dy, w, dx)
        return ((dy * W + w) * 2 + dx) * Cout

    def jtcol(dy, w, dx):  # first column of the Cmid group at (dy, w, dx)
        return ((dy * W + w) * 2 + dx) * Cmid

    # Fused projection weight: [ main (replicated over dy,dx) | ext1 ].
    Wproj = np.zeros((W * Cin, WIDE + EXT), np.float32)
    bproj = np.zeros((1, WIDE + EXT), np.float32)
    for w in range(W):
        rows = slice(w * Cin, (w + 1) * Cin)
        for dy in range(2):
            for dx in range(2):
                c0 = jcol(dy, w, dx)
                Wproj[rows, c0:c0 + Cout] = wm_s
                bproj[0, c0:c0 + Cout] = bm
        Wproj[rows, WIDE + w * Cmid:WIDE + (w + 1) * Cmid] = we1_s
        bproj[0, WIDE + w * Cmid:WIDE + (w + 1) * Cmid] = b1

    # Fused 2x2 / stride-2 transposed conv: [w, cm] -> [dy, w, dx, cm].
    Wt4 = np.zeros((W * Cmid, TCOL), np.float32)
    bt4 = np.zeros((1, TCOL), np.float32)
    for w in range(W):
        rows = slice(w * Cmid, (w + 1) * Cmid)
        for dy in range(2):
            for dx in range(2):
                c0 = jtcol(dy, w, dx)
                Wt4[rows, c0:c0 + Cmid] = wt_s[dy, dx]
                bt4[0, c0:c0 + Cmid] = bt

    # Block-diagonal expansion: [dy, w, dx, cm] -> [dy, w, dx, c].
    We2 = np.zeros((TCOL, WIDE), np.float32)
    b24 = np.zeros((1, WIDE), np.float32)
    for dy in range(2):
        for w in range(W):
            for dx in range(2):
                r0 = jtcol(dy, w, dx)
                c0 = jcol(dy, w, dx)
                We2[r0:r0 + Cmid, c0:c0 + Cout] = we2_s
                b24[0, c0:c0 + Cout] = b2

    # 0/1 replication matrix: [w, c] -> [dy, w, dx, c].
    R = np.zeros((W * Cout, WIDE), np.float32)
    for w in range(W):
        for dy in range(2):
            for dx in range(2):
                c0 = jcol(dy, w, dx)
                for c in range(Cout):
                    R[w * Cout + c, c0 + c] = 1.0

    # Precomputed per-column unpool target offset: dy*2W + 2w + dx (row base
    # 4*W*row is added in-kernel with one iota — no div/mod on the VPU).
    tcol = np.zeros((1, WIDE), np.float32)
    for dy in range(2):
        for w in range(W):
            for dx in range(2):
                c0 = jcol(dy, w, dx)
                tcol[0, c0:c0 + Cout] = dy * (2 * W) + 2 * w + dx

    return dict(Wproj=jnp.asarray(Wproj), bproj=jnp.asarray(bproj),
                Wt4=jnp.asarray(Wt4), bt4=jnp.asarray(bt4),
                We2=jnp.asarray(We2), b24=jnp.asarray(b24),
                R=jnp.asarray(R), tcol=jnp.asarray(tcol))


# ----------------------------------------------------------------------------
# Wrapper
# ----------------------------------------------------------------------------
def upsampling_bottleneck(x_nhwc, idx_nhwc, fused):
    """x_nhwc: (N,H,W,Cin) f32; idx_nhwc: (N,H,W,Cout) i32 flat pool indices.

    Returns NHWC output (N, 2H, 2W, Cout).  All wrapper reshapes are pure
    row-major splits/merges (free); there is no post-kernel transpose.
    """
    N, H, W, Cin = x_nhwc.shape
    Cout = idx_nhwc.shape[-1]
    WIDE = 4 * W * Cout

    xr = x_nhwc.reshape(N, H, W * Cin)                    # lane-dense (…, 8, 128)
    idxr = idx_nhwc.astype(jnp.int32).reshape(N, H, W * Cout)

    mats = [fused["Wproj"], fused["bproj"], fused["Wt4"], fused["bt4"],
            fused["We2"], fused["b24"], fused["R"], fused["tcol"]]

    kern = functools.partial(_upsampling_bottleneck_kernel, W=W)
    out = pl.pallas_call(
        kern,
        out_shape=jax.ShapeDtypeStruct((N, H, WIDE), jnp.float32),
        grid=(N,),
        in_specs=[pl.BlockSpec((1, H, W * Cin), lambda n: (n, 0, 0)),
                  pl.BlockSpec((1, H, W * Cout), lambda n: (n, 0, 0))]
                 + [pl.BlockSpec(m.shape, lambda n: (0, 0)) for m in mats],
        out_specs=pl.BlockSpec((1, H, WIDE), lambda n: (n, 0, 0)),
        compiler_params=pltpu.CompilerParams(
            dimension_semantics=("parallel",)),   # 2-way -> both TCs on v7x
    )(xr, idxr, *mats)

    # (N, H, 4*W*Cout) -> (N, 2H, 2W, Cout): pure row-major split, no transpose.
    return out.reshape(N, 2 * H, 2 * W, Cout)


# ----------------------------------------------------------------------------
# Pure-JAX reference (raw, unfused params) for a correctness check.
# ----------------------------------------------------------------------------
def reference_nhwc(x, idx, p):
    N, H, W, Cin = x.shape
    Cout = p["wm"].shape[1]
    x2 = x.reshape(N, H * W, Cin)
    main = ((x2 @ p["wm"]) * p["sm"] + p["bm"]).reshape(N, H, W, Cout)
    ext1 = jnp.maximum((x2 @ p["we1"]) * p["s1"] + p["b1"], 0.0)
    hh = lax.broadcasted_iota(jnp.int32, (H, W), 0)
    ww = lax.broadcasted_iota(jnp.int32, (H, W), 1)
    out = jnp.zeros((N, 2 * H, 2 * W, Cout), jnp.float32)
    for dy in range(2):
        for dx in range(2):
            t = jnp.maximum((ext1 @ p["wt"][dy, dx]) * p["st"] + p["bt"], 0.0)
            e2 = ((t @ p["we2"]) * p["s2"] + p["b2"]).reshape(N, H, W, Cout)
            flat = (2 * hh + dy) * (2 * W) + (2 * ww + dx)
            m_up = jnp.where(idx == flat[None, :, :, None], main, 0.0)
            out = out.at[:, dy::2, dx::2, :].set(jnp.maximum(m_up + e2, 0.0))
    return out


# ----------------------------------------------------------------------------
# Deterministic parameter construction (BN folded into scale/shift, eval mode)
# ----------------------------------------------------------------------------
def make_params(key, cin, cout, internal_ratio=4):
    cmid = cin // internal_ratio
    ks = jax.random.split(key, 16)
    eps = 1e-5

    def bn(k, c):
        k1, k2, k3, k4 = jax.random.split(k, 4)
        gamma = 1.0 + 0.1 * jax.random.normal(k1, (c,), jnp.float32)
        beta = 0.1 * jax.random.normal(k2, (c,), jnp.float32)
        mean = 0.1 * jax.random.normal(k3, (c,), jnp.float32)
        var = 1.0 + 0.5 * jax.random.uniform(k4, (c,), jnp.float32)
        scale = gamma / jnp.sqrt(var + eps)
        shift = beta - mean * scale
        return scale.reshape(1, c), shift.reshape(1, c)

    sm, bm = bn(ks[0], cout)
    s1, b1 = bn(ks[1], cmid)
    st, bt = bn(ks[2], cmid)
    s2, b2 = bn(ks[3], cout)
    return {
        "wm": 0.3 * jax.random.normal(ks[4], (cin, cout), jnp.float32),
        "sm": sm, "bm": bm,
        "we1": 0.3 * jax.random.normal(ks[5], (cin, cmid), jnp.float32),
        "s1": s1, "b1": b1,
        # ConvTranspose2d weight re-laid-out as (kH=dy, kW=dx, Cin, Cout)
        "wt": 0.3 * jax.random.normal(ks[6], (2, 2, cmid, cmid), jnp.float32),
        "st": st, "bt": bt,
        "we2": 0.3 * jax.random.normal(ks[7], (cmid, cout), jnp.float32),
        "s2": s2, "b2": b2,
    }


if __name__ == "__main__":
    # Small shapes consistent with the module:
    #   in_channels=16, out_channels=8, internal_ratio=4 -> internal=4
    #   x: (N=2, Cin=16, H=8, W=8), output spatial = (16, 16)
    N, Cin, Cout, H, W = 2, 16, 8, 8, 8
    key = jax.random.PRNGKey(0)
    kx, kdy, kdx, kp = jax.random.split(key, 4)

    # NCHW inputs (PyTorch convention) ...
    x_nchw = jax.random.normal(kx, (N, Cin, H, W), jnp.float32)
    # max-pool indices: flat indices into the (2H)*(2W) plane, one per
    # (n, c, h, w), always inside the corresponding 2x2 window (as produced
    # by MaxPool2d(kernel_size=2, stride=2, return_indices=True)).
    dy = jax.random.randint(kdy, (N, Cout, H, W), 0, 2)
    dx = jax.random.randint(kdx, (N, Cout, H, W), 0, 2)
    hh = jnp.arange(H).reshape(1, 1, H, 1)
    ww = jnp.arange(W).reshape(1, 1, 1, W)
    max_indices_nchw = ((2 * hh + dy) * (2 * W) + (2 * ww + dx)).astype(jnp.int32)

    # ... converted to the kernel's NHWC layout at the model boundary.
    x_nhwc = x_nchw.transpose(0, 2, 3, 1)
    idx_nhwc = max_indices_nchw.transpose(0, 2, 3, 1)

    params = make_params(kp, Cin, Cout, internal_ratio=4)
    fused = fuse_params(params, H, W)      # one-time host-side precompute

    fwd = jax.jit(upsampling_bottleneck)
    out = jax.block_until_ready(fwd(x_nhwc, idx_nhwc, fused))
    assert out.shape == (N, 2 * H, 2 * W, Cout), out.shape

    ref = reference_nhwc(x_nhwc, idx_nhwc, params)
    assert jnp.allclose(out, ref, atol=1e-4, rtol=1e-4), \
        float(jnp.max(jnp.abs(out - ref)))

    # TODO(synk): Dropout2d with p>0 (training mode) would need pltpu PRNG;
    # default p=0 is the identity and is what is implemented here.
    print("KERNEL_OK")
</pallas_src>

<mosaic_0001>
module attributes {stable_mosaic.version = 11 : i64} {
  func.func @_upsampling_bottleneck_kernel(%arg0: i32, %arg1: memref<1x8x128xf32, #tpu.memory_space<vmem>>, %arg2: memref<1x8x64xi32, #tpu.memory_space<vmem>>, %arg3: memref<128x288xf32, #tpu.memory_space<vmem>>, %arg4: memref<1x288xf32, #tpu.memory_space<vmem>>, %arg5: memref<32x128xf32, #tpu.memory_space<vmem>>, %arg6: memref<1x128xf32, #tpu.memory_space<vmem>>, %arg7: memref<128x256xf32, #tpu.memory_space<vmem>>, %arg8: memref<1x256xf32, #tpu.memory_space<vmem>>, %arg9: memref<64x256xf32, #tpu.memory_space<vmem>>, %arg10: memref<1x256xf32, #tpu.memory_space<vmem>>, %arg11: memref<1x8x256xf32, #tpu.memory_space<vmem>>) attributes {dimension_semantics = [#tpu.dimension_semantics<parallel>], iteration_bounds = array<i64: 2>, scalar_prefetch = 0 : i64, scratch_operands = 0 : i64, tpu.core_type = #tpu.core_type<tc>, window_params = [{transform_indices = @transform_0, window_bounds = array<i64: 1, 8, 128>}, {transform_indices = @transform_1, window_bounds = array<i64: 1, 8, 64>}, {pipeline_mode = #tpu.pipeline_mode<synchronous>, transform_indices = @transform_2, window_bounds = array<i64: 128, 288>}, {pipeline_mode = #tpu.pipeline_mode<synchronous>, transform_indices = @transform_3, window_bounds = array<i64: 1, 288>}, {pipeline_mode = #tpu.pipeline_mode<synchronous>, transform_indices = @transform_4, window_bounds = array<i64: 32, 128>}, {pipeline_mode = #tpu.pipeline_mode<synchronous>, transform_indices = @transform_5, window_bounds = array<i64: 1, 128>}, {pipeline_mode = #tpu.pipeline_mode<synchronous>, transform_indices = @transform_6, window_bounds = array<i64: 128, 256>}, {pipeline_mode = #tpu.pipeline_mode<synchronous>, transform_indices = @transform_7, window_bounds = array<i64: 1, 256>}, {pipeline_mode = #tpu.pipeline_mode<synchronous>, transform_indices = @transform_8, window_bounds = array<i64: 64, 256>}, {pipeline_mode = #tpu.pipeline_mode<synchronous>, transform_indices = @transform_9, window_bounds = array<i64: 1, 256>}, {transform_indices = @transform_10, window_bounds = array<i64: 1, 8, 256>}]} {
    %c0 = arith.constant 0 : index
    %c0_0 = arith.constant 0 : index
    %c0_1 = arith.constant 0 : index
    %0 = vector.load %arg1[%c0, %c0_0, %c0_1] : memref<1x8x128xf32, #tpu.memory_space<vmem>>, vector<1x8x128xf32>
    %1 = vector.shape_cast %0 : vector<1x8x128xf32> to vector<8x128xf32>
    %c0_2 = arith.constant 0 : index
    %c0_3 = arith.constant 0 : index
    %2 = vector.load %arg3[%c0_2, %c0_3] : memref<128x288xf32, #tpu.memory_space<vmem>>, vector<128x288xf32>
    %cst = arith.constant dense<0.000000e+00> : vector<8x288xf32>
    %3 = tpu.matmul %1, %2, %cst {dimension_numbers = #tpu.dot_dimension_numbers<[1], [0], [0], [1], [0, 0, 1, 1], [], []>} : vector<8x128xf32>, vector<128x288xf32>, vector<8x288xf32> -> vector<8x288xf32>
    %c0_4 = arith.constant 0 : index
    %c0_5 = arith.constant 0 : index
    %4 = vector.load %arg4[%c0_4, %c0_5] : memref<1x288xf32, #tpu.memory_space<vmem>>, vector<1x288xf32>
    %5 = vector.broadcast %4 : vector<1x288xf32> to vector<8x288xf32>
    %6 = arith.addf %3, %5 : vector<8x288xf32>
    %7 = vector.extract_strided_slice %6 {offsets = [0, 0], sizes = [8, 256], strides = [1, 1]} : vector<8x288xf32> to vector<8x256xf32>
    %8 = vector.extract_strided_slice %6 {offsets = [0, 256], sizes = [8, 32], strides = [1, 1]} : vector<8x288xf32> to vector<8x32xf32>
    %cst_6 = arith.constant 0.000000e+00 : f32
    %9 = vector.broadcast %cst_6 : f32 to vector<8x32xf32>
    %10 = arith.maximumf %8, %9 : vector<8x32xf32>
    %c0_7 = arith.constant 0 : index
    %c0_8 = arith.constant 0 : index
    %11 = vector.load %arg5[%c0_7, %c0_8] : memref<32x128xf32, #tpu.memory_space<vmem>>, vector<32x128xf32>
    %cst_9 = arith.constant dense<0.000000e+00> : vector<8x128xf32>
    %12 = tpu.matmul %10, %11, %cst_9 {dimension_numbers = #tpu.dot_dimension_numbers<[1], [0], [0], [1], [0, 0, 1, 1], [], []>} : vector<8x32xf32>, vector<32x128xf32>, vector<8x128xf32> -> vector<8x128xf32>
    %c0_10 = arith.constant 0 : index
    %c0_11 = arith.constant 0 : index
    %13 = vector.load %arg6[%c0_10, %c0_11] : memref<1x128xf32, #tpu.memory_space<vmem>>, vector<1x128xf32>
    %14 = vector.broadcast %13 : vector<1x128xf32> to vector<8x128xf32>
    %15 = arith.addf %12, %14 : vector<8x128xf32>
    %cst_12 = arith.constant 0.000000e+00 : f32
    %16 = vector.broadcast %cst_12 : f32 to vector<8x128xf32>
    %17 = arith.maximumf %15, %16 : vector<8x128xf32>
    %c0_13 = arith.constant 0 : index
    %c0_14 = arith.constant 0 : index
    %18 = vector.load %arg7[%c0_13, %c0_14] : memref<128x256xf32, #tpu.memory_space<vmem>>, vector<128x256xf32>
    %cst_15 = arith.constant dense<0.000000e+00> : vector<8x256xf32>
    %19 = tpu.matmul %17, %18, %cst_15 {dimension_numbers = #tpu.dot_dimension_numbers<[1], [0], [0], [1], [0, 0, 1, 1], [], []>} : vector<8x128xf32>, vector<128x256xf32>, vector<8x256xf32> -> vector<8x256xf32>
    %c0_16 = arith.constant 0 : index
    %c0_17 = arith.constant 0 : index
    %20 = vector.load %arg8[%c0_16, %c0_17] : memref<1x256xf32, #tpu.memory_space<vmem>>, vector<1x256xf32>
    %21 = vector.broadcast %20 : vector<1x256xf32> to vector<8x256xf32>
    %22 = arith.addf %19, %21 : vector<8x256xf32>
    %23 = tpu.iota {dimensions = array<i32: 0>} : vector<8x64xi32>
    %c0_18 = arith.constant 0 : index
    %c0_19 = arith.constant 0 : index
    %c0_20 = arith.constant 0 : index
    %24 = vector.load %arg2[%c0_18, %c0_19, %c0_20] : memref<1x8x64xi32, #tpu.memory_space<vmem>>, vector<1x8x64xi32>
    %25 = vector.shape_cast %24 : vector<1x8x64xi32> to vector<8x64xi32>
    %c32_i32 = arith.constant 32 : i32
    %26 = vector.broadcast %c32_i32 : i32 to vector<8x64xi32>
    %27 = arith.muli %26, %23 : vector<8x64xi32>
    %28 = arith.subi %25, %27 : vector<8x64xi32>
    %29 = arith.sitofp %28 : vector<8x64xi32> to vector<8x64xf32>
    %c0_21 = arith.constant 0 : index
    %c0_22 = arith.constant 0 : index
    %30 = vector.load %arg9[%c0_21, %c0_22] : memref<64x256xf32, #tpu.memory_space<vmem>>, vector<64x256xf32>
    %cst_23 = arith.constant dense<0.000000e+00> : vector<8x256xf32>
    %31 = tpu.matmul %29, %30, %cst_23 {dimension_numbers = #tpu.dot_dimension_numbers<[1], [0], [0], [1], [0, 0, 1, 1], [], []>} : vector<8x64xf32>, vector<64x256xf32>, vector<8x256xf32> -> vector<8x256xf32>
    %c0_24 = arith.constant 0 : index
    %c0_25 = arith.constant 0 : index
    %32 = vector.load %arg10[%c0_24, %c0_25] : memref<1x256xf32, #tpu.memory_space<vmem>>, vector<1x256xf32>
    %33 = vector.broadcast %32 : vector<1x256xf32> to vector<8x256xf32>
    %34 = arith.subf %31, %33 : vector<8x256xf32>
    %35 = math.absf %34 : vector<8x256xf32>
    %cst_26 = arith.constant 5.000000e-01 : f32
    %36 = vector.broadcast %cst_26 : f32 to vector<8x256xf32>
    %37 = arith.cmpf olt, %35, %36 : vector<8x256xf32>
    %cst_27 = arith.constant 0.000000e+00 : f32
    %38 = vector.broadcast %cst_27 : f32 to vector<8x256xf32>
    %39 = arith.select %37, %7, %38 : vector<8x256xi1>, vector<8x256xf32>
    %40 = arith.addf %39, %22 : vector<8x256xf32>
    %cst_28 = arith.constant 0.000000e+00 : f32
    %41 = vector.broadcast %cst_28 : f32 to vector<8x256xf32>
    %42 = arith.maximumf %40, %41 : vector<8x256xf32>
    %c0_29 = arith.constant 0 : index
    %c0_30 = arith.constant 0 : index
    %c0_31 = arith.constant 0 : index
    %43 = vector.load %arg11[%c0_29, %c0_30, %c0_31] : memref<1x8x256xf32, #tpu.memory_space<vmem>>, vector<1x8x256xf32>
    %44 = vector.shape_cast %43 : vector<1x8x256xf32> to vector<8x256xf32>
    %45 = vector.shape_cast %42 : vector<8x256xf32> to vector<1x8x256xf32>
    tpu.vector_store %arg11[%c0_29, %c0_30, %c0_31], %45 {strides = array<i32>} : memref<1x8x256xf32, #tpu.memory_space<vmem>>, vector<1x8x256xf32>,
    return
  }
  func.func @transform_0(%arg0: i32) -> (i32, i32, i32) {
    %c0_i32 = arith.constant 0 : i32
    %c0_i32_0 = arith.constant 0 : i32
    %c0_i32_1 = arith.constant 0 : i32
    return %arg0, %c0_i32, %c0_i32_0 : i32, i32, i32
  }
  func.func @transform_1(%arg0: i32) -> (i32, i32, i32) {
    %c0_i32 = arith.constant 0 : i32
    %c0_i32_0 = arith.constant 0 : i32
    %c0_i32_1 = arith.constant 0 : i32
    return %arg0, %c0_i32, %c0_i32_0 : i32, i32, i32
  }
  func.func @transform_2(%arg0: i32) -> (i32, i32) {
    %c0_i32 = arith.constant 0 : i32
    %c0_i32_0 = arith.constant 0 : i32
    %c0_i32_1 = arith.constant 0 : i32
    return %c0_i32, %c0_i32_0 : i32, i32
  }
  func.func @transform_3(%arg0: i32) -> (i32, i32) {
    %c0_i32 = arith.constant 0 : i32
    %c0_i32_0 = arith.constant 0 : i32
    %c0_i32_1 = arith.constant 0 : i32
    return %c0_i32, %c0_i32_0 : i32, i32
  }
  func.func @transform_4(%arg0: i32) -> (i32, i32) {
    %c0_i32 = arith.constant 0 : i32
    %c0_i32_0 = arith.constant 0 : i32
    %c0_i32_1 = arith.constant 0 : i32
    return %c0_i32, %c0_i32_0 : i32, i32
  }
  func.func @transform_5(%arg0: i32) -> (i32, i32) {
    %c0_i32 = arith.constant 0 : i32
    %c0_i32_0 = arith.constant 0 : i32
    %c0_i32_1 = arith.constant 0 : i32
    return %c0_i32, %c0_i32_0 : i32, i32
  }
  func.func @transform_6(%arg0: i32) -> (i32, i32) {
    %c0_i32 = arith.constant 0 : i32
    %c0_i32_0 = arith.constant 0 : i32
    %c0_i32_1 = arith.constant 0 : i32
    return %c0_i32, %c0_i32_0 : i32, i32
  }
  func.func @transform_7(%arg0: i32) -> (i32, i32) {
    %c0_i32 = arith.constant 0 : i32
    %c0_i32_0 = arith.constant 0 : i32
    %c0_i32_1 = arith.constant 0 : i32
    return %c0_i32, %c0_i32_0 : i32, i32
  }
  func.func @transform_8(%arg0: i32) -> (i32, i32) {
    %c0_i32 = arith.constant 0 : i32
    %c0_i32_0 = arith.constant 0 : i32
    %c0_i32_1 = arith.constant 0 : i32
    return %c0_i32, %c0_i32_0 : i32, i32
  }
  func.func @transform_9(%arg0: i32) -> (i32, i32) {
    %c0_i32 = arith.constant 0 : i32
    %c0_i32_0 = arith.constant 0 : i32
    %c0_i32_1 = arith.constant 0 : i32
    return %c0_i32, %c0_i32_0 : i32, i32
  }
  func.func @transform_10(%arg0: i32) -> (i32, i32, i32) {
    %c0_i32 = arith.constant 0 : i32
    %c0_i32_0 = arith.constant 0 : i32
    %c0_i32_1 = arith.constant 0 : i32
    return %arg0, %c0_i32, %c0_i32_0 : i32, i32, i32
  }
}

</mosaic_0001>

<llo_original>
// kernel: upsampling_bottleneck.1
$region0: #{upsampling_bottleneck.1}
  #allocation0 [shape = 'u32[]', space=smem, size = 0x4, offset = 0x4, fixed_abs, tag = 'smem constant byte address 0x4 - core index']
  #allocation1 [shape = 'u32[144,128]{1,0:T(1,128)}', space=vmem, size = 0x12000, scoped, tag = 'internal scratch']
  %s0 = inlined_call_operand.vmem [shape: f32[2,8,128], index: 0, kind: input, shape index: {}]
  %s1 = inlined_call_operand.vmem [shape: s32[2,8,64], index: 1, kind: input, shape index: {}]
  %s2 = inlined_call_operand.vmem [shape: f32[128,288], index: 2, kind: input, shape index: {}]
  %s3 = inlined_call_operand.vmem [shape: f32[1,288], index: 3, kind: input, shape index: {}]
  %s4 = inlined_call_operand.vmem [shape: f32[32,128], index: 4, kind: input, shape index: {}]
  %s5 = inlined_call_operand.vmem [shape: f32[1,128], index: 5, kind: input, shape index: {}]
  %s6 = inlined_call_operand.vmem [shape: f32[128,256], index: 6, kind: input, shape index: {}]
  %s7 = inlined_call_operand.vmem [shape: f32[1,256], index: 7, kind: input, shape index: {}]
  %s8 = inlined_call_operand.vmem [shape: f32[64,256], index: 8, kind: input, shape index: {}]
  %s9 = inlined_call_operand.vmem [shape: f32[1,256], index: 9, kind: input, shape index: {}]
  %s10 = inlined_call_operand.vmem [shape: f32[2,8,256], index: 10, kind: output, shape index: {}]
  %s11 = sld [smem:[#allocation0]]
  $region73: #{upsampling_bottleneck.1} parent=0
    _
  %s13 = ssub.s32 1, %s11
  %s14 = scalar_select 0, %s13, %s11
  loop: start=0, step=1, limit=4
  $region2: #{upsampling_bottleneck.1} parent=0 // loop_pre_header
    _
  $region3: #{upsampling_bottleneck.1} parent=0 // loop_header
    %s16 = sphi 0, %s20
    %p17 = scmp.ge.s32.totalorder %s16, 4
    %s26 = sphi 0, %s28
    %s29 = sphi 0, %s26
    %s30 = sphi 0, %s29
    %s46 = sphi 0, %s30
    %s52 = sphi 0, %s54
    %s55 = sphi 0, %s52
    %s56 = sphi 0, %s55
    %s72 = sphi 0, %s56
    %s76 = sphi 0, %s76
    %s78 = sphi 0, %s76
    %s79 = sphi 0, %s78
    %s93 = sphi 0, %s79
    %s97 = sphi 0, %s97
    %s99 = sphi 0, %s97
    %s100 = sphi 0, %s99
    %s114 = sphi 0, %s100
    %s118 = sphi 0, %s118
    %s120 = sphi 0, %s118
    %s121 = sphi 0, %s120
    %s135 = sphi 0, %s121
    %s139 = sphi 0, %s139
    %s141 = sphi 0, %s139
    %s142 = sphi 0, %s141
    %s156 = sphi 0, %s142
    %s160 = sphi 0, %s160
    %s162 = sphi 0, %s160
    %s163 = sphi 0, %s162
    %s177 = sphi 0, %s163
    %s181 = sphi 0, %s181
    %s183 = sphi 0, %s181
    %s184 = sphi 0, %s183
    %s198 = sphi 0, %s184
    %s202 = sphi 0, %s202
    %s204 = sphi 0, %s202
    %s205 = sphi 0, %s204
    %s219 = sphi 0, %s205
    %s223 = sphi 0, %s223
    %s225 = sphi 0, %s223
    %s226 = sphi 0, %s225
    %s240 = sphi 0, %s226
    %s246 = sphi 0, %s248
    %s249 = sphi 0, %s246
    %s250 = sphi 0, %s249
    %s266 = sphi 0, %s250
  $region4: #{upsampling_bottleneck.1} parent=0 // loop_header_branch
    %19 = sbr.rel (%p17) target = $region8
  $region5: #{upsampling_bottleneck.1} parent=0 // loop_body
    %s21 = ssub.s32 %s16, 1
    %s22 = ssub.s32 %s16, 2
    %s23 = sadd.s32 %s16, 1
    %s24 = ssub.s32 %s16, %s23
    %p25 = scmp.eq.s32.totalorder %s24, 0
    %s27 = sadd.s32 %s26, 1
    %s28 = scalar_select %p25, %s26, %s27
    %p31 = pneg %p25
    %p32 = scmp.eq.s32.totalorder %s16, 1
    %p33 = por %p31, %p32
    %p34 = scmp.ne.s32.totalorder %s26, %s29
    %p35 = scmp.eq.s32.totalorder %s16, 0
    %p36 = por %p34, %p35
    %p37 = scmp.ne.s32.totalorder %s26, %s29
    %p38 = scmp.eq.s32.totalorder %s21, 1
    %p39 = por %p37, %p38
    %p40 = scmp.ne.s32.totalorder %s29, %s30
    %p41 = scmp.eq.s32.totalorder %s21, 0
    %p42 = por %p40, %p41
    %p43 = scmp.ne.s32.totalorder %s29, %s30
    %p44 = scmp.eq.s32.totalorder %s22, 1
    %p45 = por %p43, %p44
    %p47 = scmp.ne.s32.totalorder %s30, %s46
    %p48 = scmp.eq.s32.totalorder %s22, 0
    %p49 = por %p47, %p48
    %s50 = ssub.s32 %s16, %s23
    %p51 = scmp.eq.s32.totalorder %s50, 0
    %s53 = sadd.s32 %s52, 1
    %s54 = scalar_select %p51, %s52, %s53
    %p57 = pneg %p51
    %p58 = scmp.eq.s32.totalorder %s16, 1
    %p59 = por %p57, %p58
    %p60 = scmp.ne.s32.totalorder %s52, %s55
    %p61 = scmp.eq.s32.totalorder %s16, 0
    %p62 = por %p60, %p61
    %p63 = scmp.ne.s32.totalorder %s52, %s55
    %p64 = scmp.eq.s32.totalorder %s21, 1
    %p65 = por %p63, %p64
    %p66 = scmp.ne.s32.totalorder %s55, %s56
    %p67 = scmp.eq.s32.totalorder %s21, 0
    %p68 = por %p66, %p67
    %p69 = scmp.ne.s32.totalorder %s55, %s56
    %p70 = scmp.eq.s32.totalorder %s22, 1
    %p71 = por %p69, %p70
    %p73 = scmp.ne.s32.totalorder %s56, %s72
    %p74 = scmp.eq.s32.totalorder %s22, 0
    %p75 = por %p73, %p74
    %s77 = sadd.s32 %s76, 1
    %p80 = scmp.eq.s32.totalorder %s16, 1
    %p81 = scmp.ne.s32.totalorder %s76, %s78
    %p82 = scmp.eq.s32.totalorder %s16, 0
    %p83 = por %p81, %p82
    %p84 = scmp.ne.s32.totalorder %s76, %s78
    %p85 = scmp.eq.s32.totalorder %s21, 1
    %p86 = por %p84, %p85
    %p87 = scmp.ne.s32.totalorder %s78, %s79
    %p88 = scmp.eq.s32.totalorder %s21, 0
    %p89 = por %p87, %p88
    %p90 = scmp.ne.s32.totalorder %s78, %s79
    %p91 = scmp.eq.s32.totalorder %s22, 1
    %p92 = por %p90, %p91
    %p94 = scmp.ne.s32.totalorder %s79, %s93
    %p95 = scmp.eq.s32.totalorder %s22, 0
    %p96 = por %p94, %p95
    %s98 = sadd.s32 %s97, 1
    %p101 = scmp.eq.s32.totalorder %s16, 1
    %p102 = scmp.ne.s32.totalorder %s97, %s99
    %p103 = scmp.eq.s32.totalorder %s16, 0
    %p104 = por %p102, %p103
    %p105 = scmp.ne.s32.totalorder %s97, %s99
    %p106 = scmp.eq.s32.totalorder %s21, 1
    %p107 = por %p105, %p106
    %p108 = scmp.ne.s32.totalorder %s99, %s100
    %p109 = scmp.eq.s32.totalorder %s21, 0
    %p110 = por %p108, %p109
    %p111 = scmp.ne.s32.totalorder %s99, %s100
    %p112 = scmp.eq.s32.totalorder %s22, 1
    %p113 = por %p111, %p112
    %p115 = scmp.ne.s32.totalorder %s100, %s114
    %p116 = scmp.eq.s32.totalorder %s22, 0
    %p117 = por %p115, %p116
    %s119 = sadd.s32 %s118, 1
    %p122 = scmp.eq.s32.totalorder %s16, 1
    %p123 = scmp.ne.s32.totalorder %s118, %s120
    %p124 = scmp.eq.s32.totalorder %s16, 0
    %p125 = por %p123, %p124
    %p126 = scmp.ne.s32.totalorder %s118, %s120
    %p127 = scmp.eq.s32.totalorder %s21, 1
    %p128 = por %p126, %p127
    %p129 = scmp.ne.s32.totalorder %s120, %s121
    %p130 = scmp.eq.s32.totalorder %s21, 0
    %p131 = por %p129, %p130
    %p132 = scmp.ne.s32.totalorder %s120, %s121
    %p133 = scmp.eq.s32.totalorder %s22, 1
    %p134 = por %p132, %p133
    %p136 = scmp.ne.s32.totalorder %s121, %s135
    %p137 = scmp.eq.s32.totalorder %s22, 0
    %p138 = por %p136, %p137
    %s140 = sadd.s32 %s139, 1
    %p143 = scmp.eq.s32.totalorder %s16, 1
    %p144 = scmp.ne.s32.totalorder %s139, %s141
    %p145 = scmp.eq.s32.totalorder %s16, 0
    %p146 = por %p144, %p145
    %p147 = scmp.ne.s32.totalorder %s139, %s141
    %p148 = scmp.eq.s32.totalorder %s21, 1
    %p149 = por %p147, %p148
    %p150 = scmp.ne.s32.totalorder %s141, %s142
    %p151 = scmp.eq.s32.totalorder %s21, 0
    %p152 = por %p150, %p151
    %p153 = scmp.ne.s32.totalorder %s141, %s142
    %p154 = scmp.eq.s32.totalorder %s22, 1
    %p155 = por %p153, %p154
    %p157 = scmp.ne.s32.totalorder %s142, %s156
    %p158 = scmp.eq.s32.totalorder %s22, 0
    %p159 = por %p157, %p158
    %s161 = sadd.s32 %s160, 1
    %p164 = scmp.eq.s32.totalorder %s16, 1
    %p165 = scmp.ne.s32.totalorder %s160, %s162
    %p166 = scmp.eq.s32.totalorder %s16, 0
    %p167 = por %p165, %p166
    %p168 = scmp.ne.s32.totalorder %s160, %s162
    %p169 = scmp.eq.s32.totalorder %s21, 1
    %p170 = por %p168, %p169
    %p171 = scmp.ne.s32.totalorder %s162, %s163
    %p172 = scmp.eq.s32.totalorder %s21, 0
    %p173 = por %p171, %p172
    %p174 = scmp.ne.s32.totalorder %s162, %s163
    %p175 = scmp.eq.s32.totalorder %s22, 1
    %p176 = por %p174, %p175
    %p178 = scmp.ne.s32.totalorder %s163, %s177
    %p179 = scmp.eq.s32.totalorder %s22, 0
    %p180 = por %p178, %p179
    %s182 = sadd.s32 %s181, 1
    %p185 = scmp.eq.s32.totalorder %s16, 1
    %p186 = scmp.ne.s32.totalorder %s181, %s183
    %p187 = scmp.eq.s32.totalorder %s16, 0
    %p188 = por %p186, %p187
    %p189 = scmp.ne.s32.totalorder %s181, %s183
    %p190 = scmp.eq.s32.totalorder %s21, 1
    %p191 = por %p189, %p190
    %p192 = scmp.ne.s32.totalorder %s183, %s184
    %p193 = scmp.eq.s32.totalorder %s21, 0
    %p194 = por %p192, %p193
    %p195 = scmp.ne.s32.totalorder %s183, %s184
    %p196 = scmp.eq.s32.totalorder %s22, 1
    %p197 = por %p195, %p196
    %p199 = scmp.ne.s32.totalorder %s184, %s198
    %p200 = scmp.eq.s32.totalorder %s22, 0
    %p201 = por %p199, %p200
    %s203 = sadd.s32 %s202, 1
    %p206 = scmp.eq.s32.totalorder %s16, 1
    %p207 = scmp.ne.s32.totalorder %s202, %s204
    %p208 = scmp.eq.s32.totalorder %s16, 0
    %p209 = por %p207, %p208
    %p210 = scmp.ne.s32.totalorder %s202, %s204
    %p211 = scmp.eq.s32.totalorder %s21, 1
    %p212 = por %p210, %p211
    %p213 = scmp.ne.s32.totalorder %s204, %s205
    %p214 = scmp.eq.s32.totalorder %s21, 0
    %p215 = por %p213, %p214
    %p216 = scmp.ne.s32.totalorder %s204, %s205
    %p217 = scmp.eq.s32.totalorder %s22, 1
    %p218 = por %p216, %p217
    %p220 = scmp.ne.s32.totalorder %s205, %s219
    %p221 = scmp.eq.s32.totalorder %s22, 0
    %p222 = por %p220, %p221
    %s224 = sadd.s32 %s223, 1
    %p227 = scmp.eq.s32.totalorder %s16, 1
    %p228 = scmp.ne.s32.totalorder %s223, %s225
    %p229 = scmp.eq.s32.totalorder %s16, 0
    %p230 = por %p228, %p229
    %p231 = scmp.ne.s32.totalorder %s223, %s225
    %p232 = scmp.eq.s32.totalorder %s21, 1
    %p233 = por %p231, %p232
    %p234 = scmp.ne.s32.totalorder %s225, %s226
    %p235 = scmp.eq.s32.totalorder %s21, 0
    %p236 = por %p234, %p235
    %p237 = scmp.ne.s32.totalorder %s225, %s226
    %p238 = scmp.eq.s32.totalorder %s22, 1
    %p239 = por %p237, %p238
    %p241 = scmp.ne.s32.totalorder %s226, %s240
    %p242 = scmp.eq.s32.totalorder %s22, 0
    %p243 = por %p241, %p242
    %s244 = ssub.s32 %s16, %s23
    %p245 = scmp.eq.s32.totalorder %s244, 0
    %s247 = sadd.s32 %s246, 1
    %s248 = scalar_select %p245, %s246, %s247
    %p251 = pneg %p245
    %p252 = scmp.eq.s32.totalorder %s16, 1
    %p253 = por %p251, %p252
    %p254 = scmp.ne.s32.totalorder %s246, %s249
    %p255 = scmp.eq.s32.totalorder %s16, 0
    %p256 = por %p254, %p255
    %p257 = scmp.ne.s32.totalorder %s246, %s249
    %p258 = scmp.eq.s32.totalorder %s21, 1
    %p259 = por %p257, %p258
    %p260 = scmp.ne.s32.totalorder %s249, %s250
    %p261 = scmp.eq.s32.totalorder %s21, 0
    %p262 = por %p260, %p261
    %p263 = scmp.ne.s32.totalorder %s249, %s250
    %p264 = scmp.eq.s32.totalorder %s22, 1
    %p265 = por %p263, %p264
    %p267 = scmp.ne.s32.totalorder %s250, %s266
    %p268 = scmp.eq.s32.totalorder %s22, 0
    %p269 = por %p267, %p268
    %p270 = scmp.le.s32.totalorder 1, %s16
    %p271 = scmp.lt.s32.totalorder %s16, 3
    %p272 = pnand %p270, %p271
    %p273 = pneg %p272
    // Predicated region
    $region9: #{upsampling_bottleneck.1} parent=5 // pred_check
      _
    $region10: #{upsampling_bottleneck.1} parent=5 // pred_check_branch
      %275 = sbr.rel (%p272) target = $region12
    $region11: #{upsampling_bottleneck.1} parent=5 // pred_region
      %s276 = ssub.s32 %s16, 1
      // Predicated region
      $region13: #{upsampling_bottleneck.1} parent=11 // pred_check
        %p277 = pneg %p89
      $region14: #{upsampling_bottleneck.1} parent=11 // pred_check_branch
        %279 = sbr.rel (%p277) target = $region16
      $region15: #{upsampling_bottleneck.1} parent=11 // pred_region
        _
      $region16: #{upsampling_bottleneck.1} parent=11 // pred_fallthru
        _
      // Predicated region
      $region17: #{upsampling_bottleneck.1} parent=11 // pred_check
        %p280 = pneg %p110
      $region18: #{upsampling_bottleneck.1} parent=11 // pred_check_branch
        %282 = sbr.rel (%p280) target = $region20
      $region19: #{upsampling_bottleneck.1} parent=11 // pred_region
        _
      $region20: #{upsampling_bottleneck.1} parent=11 // pred_fallthru
        _
      // Predicated region
      $region21: #{upsampling_bottleneck.1} parent=11 // pred_check
        %p283 = pneg %p131
      $region22: #{upsampling_bottleneck.1} parent=11 // pred_check_branch
        %285 = sbr.rel (%p283) target = $region24
      $region23: #{upsampling_bottleneck.1} parent=11 // pred_region
        _
      $region24: #{upsampling_bottleneck.1} parent=11 // pred_fallthru
        _
      // Predicated region
      $region25: #{upsampling_bottleneck.1} parent=11 // pred_check
        %p286 = pneg %p152
      $region26: #{upsampling_bottleneck.1} parent=11 // pred_check_branch
        %288 = sbr.rel (%p286) target = $region28
      $region27: #{upsampling_bottleneck.1} parent=11 // pred_region
        _
      $region28: #{upsampling_bottleneck.1} parent=11 // pred_fallthru
        _
      // Predicated region
      $region29: #{upsampling_bottleneck.1} parent=11 // pred_check
        %p289 = pneg %p173
      $region30: #{upsampling_bottleneck.1} parent=11 // pred_check_branch
        %291 = sbr.rel (%p289) target = $region32
      $region31: #{upsampling_bottleneck.1} parent=11 // pred_region
        _
      $region32: #{upsampling_bottleneck.1} parent=11 // pred_fallthru
        _
      // Predicated region
      $region33: #{upsampling_bottleneck.1} parent=11 // pred_check
        %p292 = pneg %p194
      $region34: #{upsampling_bottleneck.1} parent=11 // pred_check_branch
        %294 = sbr.rel (%p292) target = $region36
      $region35: #{upsampling_bottleneck.1} parent=11 // pred_region
        _
      $region36: #{upsampling_bottleneck.1} parent=11 // pred_fallthru
        _
      // Predicated region
      $region37: #{upsampling_bottleneck.1} parent=11 // pred_check
        %p295 = pneg %p215
      $region38: #{upsampling_bottleneck.1} parent=11 // pred_check_branch
        %297 = sbr.rel (%p295) target = $region40
      $region39: #{upsampling_bottleneck.1} parent=11 // pred_region
        _
      $region40: #{upsampling_bottleneck.1} parent=11 // pred_fallthru
        _
      // Predicated region
      $region41: #{upsampling_bottleneck.1} parent=11 // pred_check
        %p298 = pneg %p236
      $region42: #{upsampling_bottleneck.1} parent=11 // pred_check_branch
        %300 = sbr.rel (%p298) target = $region44
      $region43: #{upsampling_bottleneck.1} parent=11 // pred_region
        _
      $region44: #{upsampling_bottleneck.1} parent=11 // pred_fallthru
        _
    $region12: #{upsampling_bottleneck.1} parent=5 // pred_fallthru
      _
    %p301 = scmp.lt.s32.totalorder %s16, 2
    // Predicated region
    $region45: #{upsampling_bottleneck.1} parent=5 // pred_check
      %p302 = pneg %p301
    $region46: #{upsampling_bottleneck.1} parent=5 // pred_check_branch
      %304 = sbr.rel (%p302) target = $region48
    $region47: #{upsampling_bottleneck.1} parent=5 // pred_region
      // Predicated region
      $region49: #{upsampling_bottleneck.1} parent=47 // pred_check
        %p305 = pneg %p36
      $region50: #{upsampling_bottleneck.1} parent=47 // pred_check_branch
        %307 = sbr.rel (%p305) target = $region52
      $region51: #{upsampling_bottleneck.1} parent=47 // pred_region
        %p308 = scmp.lt.s32.totalorder %s16, 1
        %s309 = scalar_select %p308, %s16, 1
        %s310 = smul.addr %s309, 8
        %s311 = scalar_lea.vmem %s0, %s310
      $region52: #{upsampling_bottleneck.1} parent=47 // pred_fallthru
        _
      // Predicated region
      $region53: #{upsampling_bottleneck.1} parent=47 // pred_check
        %p312 = pneg %p62
      $region54: #{upsampling_bottleneck.1} parent=47 // pred_check_branch
        %314 = sbr.rel (%p312) target = $region56
      $region55: #{upsampling_bottleneck.1} parent=47 // pred_region
        %p315 = scmp.lt.s32.totalorder %s16, 1
        %s316 = scalar_select %p315, %s16, 1
        %s317 = smul.addr %s316, 8
        %s318 = scalar_lea.vmem %s1, %s317
      $region56: #{upsampling_bottleneck.1} parent=47 // pred_fallthru
        _
    $region48: #{upsampling_bottleneck.1} parent=5 // pred_fallthru
      _
    %p319 = scmp.le.s32.totalorder 1, %s16
    %p320 = scmp.lt.s32.totalorder %s16, 3
    %p321 = pnand %p319, %p320
    %p322 = pneg %p321
    // Predicated region
    $region57: #{upsampling_bottleneck.1} parent=5 // pred_check
      _
    $region58: #{upsampling_bottleneck.1} parent=5 // pred_check_branch
      %324 = sbr.rel (%p321) target = $region60
    $region59: #{upsampling_bottleneck.1} parent=5 // pred_region
      %s325 = ssub.s32 %s16, 1
      %p326 = scmp.lt.s32.totalorder %s21, 1
      %s327 = scalar_select %p326, %s21, 1
      %s328 = smul.addr %s327, 8
      %s329 = scalar_lea.vmem %s0, %s328
      %p330 = pneg %p42
      %p331 = pneg %p39
      %p332 = scmp.lt.s32.totalorder %s21, 1
      %s333 = scalar_select %p332, %s21, 1
      %s334 = smul.addr %s333, 8
      %s335 = scalar_lea.vmem %s1, %s334
      %p336 = pneg %p68
      %p337 = pneg %p65
      %p338 = pneg %p89
      %p339 = pneg %p86
      %p340 = pneg %p110
      %p341 = pneg %p107
      %p342 = pneg %p131
      %p343 = pneg %p128
      %p344 = pneg %p152
      %p345 = pneg %p149
      %p346 = pneg %p173
      %p347 = pneg %p170
      %p348 = pneg %p194
      %p349 = pneg %p191
      %p350 = pneg %p215
      %p351 = pneg %p212
      %p352 = pneg %p236
      %p353 = pneg %p233
      %p354 = pneg %p262
      %p355 = pneg %p259
      %p356 = scmp.lt.s32.totalorder %s21, 1
      %s357 = scalar_select %p356, %s21, 1
      %s358 = smul.addr %s357, 2
      %s359 = smul.addr %s358, 8
      %s360 = scalar_lea.vmem %s10, %s359
      %p361 = scmp.lt.s32.totalorder %s21, 1
      %s362 = scalar_select %p361, %s21, 1
      %s363 = smul.addr %s362, 8
      %s364 = scalar_lea.vmem %s0, %s363
      %p365 = scmp.lt.s32.totalorder %s21, 1
      %s366 = scalar_select %p365, %s21, 1
      %s367 = smul.addr %s366, 8
      %s368 = scalar_lea.vmem %s1, %s367
      %p369 = scmp.lt.s32.totalorder %s21, 1
      %s370 = scalar_select %p369, %s21, 1
      %s371 = smul.addr %s370, 2
      %s372 = smul.addr %s371, 8
      %s373 = scalar_lea.vmem %s10, %s372
      %v374 = vld [vmem:[%s364] sm:$0xff]
      %v375 = vld [vmem:[%s2] sm:$0xff]
      %v376 = vld [vmem:[%s2 + $0x8] sm:$0xff]
      %v377 = vld [vmem:[%s2 + $0x10] sm:$0xff]
      %v378 = vld [vmem:[%s2 + $0x18] sm:$0xff]
      %v379 = vld [vmem:[%s2 + $0x20] sm:$0xff]
      %v380 = vld [vmem:[%s2 + $0x28] sm:$0xff]
      %v381 = vld [vmem:[%s2 + $0x30] sm:$0xff]
      %v382 = vld [vmem:[%s2 + $0x38] sm:$0xff]
      %v383 = vld [vmem:[%s2 + $0x40] sm:$0xff]
      %v384 = vld [vmem:[%s2 + $0x48] sm:$0xff]
      %v385 = vld [vmem:[%s2 + $0x50] sm:$0xff]
      %v386 = vld [vmem:[%s2 + $0x58] sm:$0xff]
      %v387 = vld [vmem:[%s2 + $0x60] sm:$0xff]
      %v388 = vld [vmem:[%s2 + $0x68] sm:$0xff]
      %v389 = vld [vmem:[%s2 + $0x70] sm:$0xff]
      %v390 = vld [vmem:[%s2 + $0x78] sm:$0xff]
      %v391 = vld [vmem:[%s2 + $0x80] sm:$0xff]
      %v392 = vld [vmem:[%s2 + $0x88] sm:$0xff]
      %v393 = vld [vmem:[%s2 + $0x90] sm:$0xff]
      %v394 = vld [vmem:[%s2 + $0x98] sm:$0xff]
      %v395 = vld [vmem:[%s2 + $0xa0] sm:$0xff]
      %v396 = vld [vmem:[%s2 + $0xa8] sm:$0xff]
      %v397 = vld [vmem:[%s2 + $0xb0] sm:$0xff]
      %v398 = vld [vmem:[%s2 + $0xb8] sm:$0xff]
      %v399 = vld [vmem:[%s2 + $0xc0] sm:$0xff]
      %v400 = vld [vmem:[%s2 + $0xc8] sm:$0xff]
      %v401 = vld [vmem:[%s2 + $0xd0] sm:$0xff]
      %v402 = vld [vmem:[%s2 + $0xd8] sm:$0xff]
      %v403 = vld [vmem:[%s2 + $0xe0] sm:$0xff]
      %v404 = vld [vmem:[%s2 + $0xe8] sm:$0xff]
      %v405 = vld [vmem:[%s2 + $0xf0] sm:$0xff]
      %v406 = vld [vmem:[%s2 + $0xf8] sm:$0xff]
      %v407 = vld [vmem:[%s2 + $0x100] sm:$0xff]
      %v408 = vld [vmem:[%s2 + $0x108] sm:$0xff]
      %v409 = vld [vmem:[%s2 + $0x110] sm:$0xff]
      %v410 = vld [vmem:[%s2 + $0x118] sm:$0xff]
      %v411 = vld [vmem:[%s2 + $0x120] sm:$0xff]
      %v412 = vld [vmem:[%s2 + $0x128] sm:$0xff]
      %v413 = vld [vmem:[%s2 + $0x130] sm:$0xff]
      %v414 = vld [vmem:[%s2 + $0x138] sm:$0xff]
      %v415 = vld [vmem:[%s2 + $0x140] sm:$0xff]
      %v416 = vld [vmem:[%s2 + $0x148] sm:$0xff]
      %v417 = vld [vmem:[%s2 + $0x150] sm:$0xff]
      %v418 = vld [vmem:[%s2 + $0x158] sm:$0xff]
      %v419 = vld [vmem:[%s2 + $0x160] sm:$0xff]
      %v420 = vld [vmem:[%s2 + $0x168] sm:$0xff]
      %v421 = vld [vmem:[%s2 + $0x170] sm:$0xff]
      %v422 = vld [vmem:[%s2 + $0x178] sm:$0xff]
      %v423 = vld [vmem:[%s3] sm:$0x7]
      %v425 = vlaneseq
      %v426 = vshrl.u32 %v425, 7
      %v427 = vsub.s32 0, %v426
      %v428 = vrot.slane %v423, %v427
      %v429 = vlaneseq
      %v430 = vshrl.u32 %v429, 7
      %v431 = vsub.s32 1, %v430
      %v432 = vrot.slane %v423, %v431
      %v433 = vlaneseq
      %v434 = vshrl.u32 %v433, 7
      %v435 = vsub.s32 2, %v434
      %v436 = vrot.slane %v423, %v435
      %440 = vmatprep.subr.mxu0 %v376
      %441 = vmatpush1.msra.mxu0 %v375
      %442 = vmatprep.subr.mxu0 %v379
      %443 = vmatpush1.msra.mxu0 %v378
      %444 = vmatprep.subr.mxu0 %v382
      %445 = vmatpush1.msra.mxu0 %v381
      %446 = vmatprep.subr.mxu0 %v385
      %447 = vmatpush1.msra.mxu0 %v384
      %448 = vmatprep.subr.mxu0 %v388
      %449 = vmatpush1.msra.mxu0 %v387
      %450 = vmatprep.subr.mxu0 %v391
      %451 = vmatpush1.msra.mxu0 %v390
      %452 = vmatprep.subr.mxu0 %v394
      %453 = vmatpush1.msra.mxu0 %v393
      %454 = vmatprep.subr.mxu0 %v397
      %455 = vmatpush1.msra.mxu0 %v396
      %456 = vmatprep.subr.mxu0 %v400
      %457 = vmatpush1.msra.mxu0 %v399
      %458 = vmatprep.subr.mxu0 %v403
      %459 = vmatpush1.msra.mxu0 %v402
      %460 = vmatprep.subr.mxu0 %v406
      %461 = vmatpush1.msra.mxu0 %v405
      %462 = vmatprep.subr.mxu0 %v409
      %463 = vmatpush1.msra.mxu0 %v408
      %464 = vmatprep.subr.mxu0 %v412
      %465 = vmatpush1.msra.mxu0 %v411
      %466 = vmatprep.subr.mxu0 %v415
      %467 = vmatpush1.msra.mxu0 %v414
      %468 = vmatprep.subr.mxu0 %v418
      %469 = vmatpush1.msra.mxu0 %v417
      %470 = vmatprep.subr.mxu0 %v421
      %471 = vmatpush1.msra.mxu0 %v420
      %472 = vmatprep.subr.mxu0 0.0
      %473 = vmatpush1.msra.mxu0 0.0
      %474 = vmatprep.subr.mxu0 0.0
      %475 = vmatpush1.msra.mxu0 0.0
      %476 = vmatprep.subr.mxu0 0.0
      %477 = vmatpush1.msra.mxu0 0.0
      %478 = vmatprep.subr.mxu0 0.0
      %479 = vmatpush1.msra.mxu0 0.0
      %480 = vmatprep.subr.mxu0 0.0
      %481 = vmatpush1.msra.mxu0 0.0
      %482 = vmatprep.subr.mxu0 0.0
      %483 = vmatpush1.msra.mxu0 0.0
      %484 = vmatprep.subr.mxu0 0.0
      %485 = vmatpush1.msra.mxu0 0.0
      %486 = vmatprep.subr.mxu0 0.0
      %487 = vmatpush1.msra.mxu0 0.0
      %488 = vmatprep.subr.mxu0 0.0
      %489 = vmatpush1.msra.mxu0 0.0
      %490 = vmatprep.subr.mxu0 0.0
      %491 = vmatpush1.msra.mxu0 0.0
      %492 = vmatprep.subr.mxu0 0.0
      %493 = vmatpush1.msra.mxu0 0.0
      %494 = vmatprep.subr.mxu0 0.0
      %495 = vmatpush1.msra.mxu0 0.0
      %496 = vmatprep.subr.mxu0 0.0
      %497 = vmatpush1.msra.mxu0 0.0
      %498 = vmatprep.subr.mxu0 0.0
      %499 = vmatpush1.msra.mxu0 0.0
      %500 = vmatprep.subr.mxu0 0.0
      %501 = vmatpush1.msra.mxu0 0.0
      %502 = vmatprep.subr.mxu0 0.0
      %503 = vmatpush1.msra.mxu0 0.0
      %504 = vmatprep.mubr.f32.mxu0 0.0
      %505 = vmatmul.mubr.f32.gmra.mrb[0].mxu0 %v374
      %v506 = vpop.f32.mrb[0].mxu0
      %v507 = vadd.f32 %v428, %v506
      %v508 = vpop.f32.mrb[0].mxu0
      %v509 = vadd.f32 %v432, %v508
      %510 = vdwg.mxu0
      %511 = vmatprep.subr.mxu0 0.0
      %512 = vmatpush1.msra.mxu0 %v377
      %513 = vmatprep.subr.mxu0 0.0
      %514 = vmatpush1.msra.mxu0 %v380
      %515 = vmatprep.subr.mxu0 0.0
      %516 = vmatpush1.msra.mxu0 %v383
      %517 = vmatprep.subr.mxu0 0.0
      %518 = vmatpush1.msra.mxu0 %v386
      %519 = vmatprep.subr.mxu0 0.0
      %520 = vmatpush1.msra.mxu0 %v389
      %521 = vmatprep.subr.mxu0 0.0
      %522 = vmatpush1.msra.mxu0 %v392
      %523 = vmatprep.subr.mxu0 0.0
      %524 = vmatpush1.msra.mxu0 %v395
      %525 = vmatprep.subr.mxu0 0.0
      %526 = vmatpush1.msra.mxu0 %v398
      %527 = vmatprep.subr.mxu0 0.0
      %528 = vmatpush1.msra.mxu0 %v401
      %529 = vmatprep.subr.mxu0 0.0
      %530 = vmatpush1.msra.mxu0 %v404
      %531 = vmatprep.subr.mxu0 0.0
      %532 = vmatpush1.msra.mxu0 %v407
      %533 = vmatprep.subr.mxu0 0.0
      %534 = vmatpush1.msra.mxu0 %v410
      %535 = vmatprep.subr.mxu0 0.0
      %536 = vmatpush1.msra.mxu0 %v413
      %537 = vmatprep.subr.mxu0 0.0
      %538 = vmatpush1.msra.mxu0 %v416
      %539 = vmatprep.subr.mxu0 0.0
      %540 = vmatpush1.msra.mxu0 %v419
      %541 = vmatprep.subr.mxu0 0.0
      %542 = vmatpush1.msra.mxu0 %v422
      %543 = vmatprep.subr.mxu0 0.0
      %544 = vmatpush1.msra.mxu0 0.0
      %545 = vmatprep.subr.mxu0 0.0
      %546 = vmatpush1.msra.mxu0 0.0
      %547 = vmatprep.subr.mxu0 0.0
      %548 = vmatpush1.msra.mxu0 0.0
      %549 = vmatprep.subr.mxu0 0.0
      %550 = vmatpush1.msra.mxu0 0.0
      %551 = vmatprep.subr.mxu0 0.0
      %552 = vmatpush1.msra.mxu0 0.0
      %553 = vmatprep.subr.mxu0 0.0
      %554 = vmatpush1.msra.mxu0 0.0
      %555 = vmatprep.subr.mxu0 0.0
      %556 = vmatpush1.msra.mxu0 0.0
      %557 = vmatprep.subr.mxu0 0.0
      %558 = vmatpush1.msra.mxu0 0.0
      %559 = vmatprep.subr.mxu0 0.0
      %560 = vmatpush1.msra.mxu0 0.0
      %561 = vmatprep.subr.mxu0 0.0
      %562 = vmatpush1.msra.mxu0 0.0
      %563 = vmatprep.subr.mxu0 0.0
      %564 = vmatpush1.msra.mxu0 0.0
      %565 = vmatprep.subr.mxu0 0.0
      %566 = vmatpush1.msra.mxu0 0.0
      %567 = vmatprep.subr.mxu0 0.0
      %568 = vmatpush1.msra.mxu0 0.0
      %569 = vmatprep.subr.mxu0 0.0
      %570 = vmatpush1.msra.mxu0 0.0
      %571 = vmatprep.subr.mxu0 0.0
      %572 = vmatpush1.msra.mxu0 0.0
      %573 = vmatprep.subr.mxu0 0.0
      %574 = vmatpush1.msra.mxu0 0.0
      %575 = vmatprep.mubr.f32.mxu0 0.0
      %576 = vmatmul.mubr.f32.gmra.mrb[0].mxu0 %v374
      %v577 = vpop.f32.mrb[0].mxu0
      %v578 = vadd.f32 %v436, %v577
      %v579 = vpop.f32.mrb[0].mxu0
      %580 = vdwg.mxu0
      %v581 = vmax.f32 %v578, 0.0
      %v582 = vld [vmem:[%s4] sm:$0xff]
      %v583 = vld [vmem:[%s4 + $0x8] sm:$0xff]
      %v584 = vld [vmem:[%s4 + $0x10] sm:$0xff]
      %v585 = vld [vmem:[%s4 + $0x18] sm:$0xff]
      %v586 = vld [vmem:[%s5] sm:$0x1]
      %v588 = vlaneseq
      %v589 = vshrl.u32 %v588, 7
      %v590 = vsub.s32 0, %v589
      %v591 = vrot.slane %v586, %v590
      %vm593 = vcmask 261120
      %v595 = vsel %vm593, %v581, 0
      %597 = vmatprep.subr.mxu0 0.0
      %598 = vmatpush1.msra.mxu0 %v582
      %599 = vmatprep.subr.mxu0 0.0
      %600 = vmatpush1.msra.mxu0 %v583
      %601 = vmatprep.subr.mxu0 0.0
      %602 = vmatpush1.msra.mxu0 %v584
      %603 = vmatprep.subr.mxu0 0.0
      %604 = vmatpush1.msra.mxu0 %v585
      %605 = vmatprep.subr.mxu0 0.0
      %606 = vmatpush1.msra.mxu0 0.0
      %607 = vmatprep.subr.mxu0 0.0
      %608 = vmatpush1.msra.mxu0 0.0
      %609 = vmatprep.subr.mxu0 0.0
      %610 = vmatpush1.msra.mxu0 0.0
      %611 = vmatprep.subr.mxu0 0.0
      %612 = vmatpush1.msra.mxu0 0.0
      %613 = vmatprep.subr.mxu0 0.0
      %614 = vmatpush1.msra.mxu0 0.0
      %615 = vmatprep.subr.mxu0 0.0
      %616 = vmatpush1.msra.mxu0 0.0
      %617 = vmatprep.subr.mxu0 0.0
      %618 = vmatpush1.msra.mxu0 0.0
      %619 = vmatprep.subr.mxu0 0.0
      %620 = vmatpush1.msra.mxu0 0.0
      %621 = vmatprep.subr.mxu0 0.0
      %622 = vmatpush1.msra.mxu0 0.0
      %623 = vmatprep.subr.mxu0 0.0
      %624 = vmatpush1.msra.mxu0 0.0
      %625 = vmatprep.subr.mxu0 0.0
      %626 = vmatpush1.msra.mxu0 0.0
      %627 = vmatprep.subr.mxu0 0.0
      %628 = vmatpush1.msra.mxu0 0.0
      %629 = vmatprep.subr.mxu0 0.0
      %630 = vmatpush1.msra.mxu0 0.0
      %631 = vmatprep.subr.mxu0 0.0
      %632 = vmatpush1.msra.mxu0 0.0
      %633 = vmatprep.subr.mxu0 0.0
      %634 = vmatpush1.msra.mxu0 0.0
      %635 = vmatprep.subr.mxu0 0.0
      %636 = vmatpush1.msra.mxu0 0.0
      %637 = vmatprep.subr.mxu0 0.0
      %638 = vmatpush1.msra.mxu0 0.0
      %639 = vmatprep.subr.mxu0 0.0
      %640 = vmatpush1.msra.mxu0 0.0
      %641 = vmatprep.subr.mxu0 0.0
      %642 = vmatpush1.msra.mxu0 0.0
      %643 = vmatprep.subr.mxu0 0.0
      %644 = vmatpush1.msra.mxu0 0.0
      %645 = vmatprep.subr.mxu0 0.0
      %646 = vmatpush1.msra.mxu0 0.0
      %647 = vmatprep.subr.mxu0 0.0
      %648 = vmatpush1.msra.mxu0 0.0
      %649 = vmatprep.subr.mxu0 0.0
      %650 = vmatpush1.msra.mxu0 0.0
      %651 = vmatprep.subr.mxu0 0.0
      %652 = vmatpush1.msra.mxu0 0.0
      %653 = vmatprep.subr.mxu0 0.0
      %654 = vmatpush1.msra.mxu0 0.0
      %655 = vmatprep.subr.mxu0 0.0
      %656 = vmatpush1.msra.mxu0 0.0
      %657 = vmatprep.subr.mxu0 0.0
      %658 = vmatpush1.msra.mxu0 0.0
      %659 = vmatprep.subr.mxu0 0.0
      %660 = vmatpush1.msra.mxu0 0.0
      %661 = vmatprep.mubr.f32.mxu0 0.0
      %662 = vmatmul.mubr.f32.gmra.mrb[0].mxu0 %v595
      %v663 = vpop.f32.mrb[0].mxu0
      %v664 = vadd.f32 %v591, %v663
      %v665 = vpop.f32.mrb[0].mxu0
      %666 = vdwg.mxu0
      %v667 = vmax.f32 %v664, 0.0
      %v668 = vld [vmem:[%s6] sm:$0xff]
      %v669 = vld [vmem:[%s6 + $0x8] sm:$0xff]
      %v670 = vld [vmem:[%s6 + $0x10] sm:$0xff]
      %v671 = vld [vmem:[%s6 + $0x18] sm:$0xff]
      %v672 = vld [vmem:[%s6 + $0x20] sm:$0xff]
      %v673 = vld [vmem:[%s6 + $0x28] sm:$0xff]
      %v674 = vld [vmem:[%s6 + $0x30] sm:$0xff]
      %v675 = vld [vmem:[%s6 + $0x38] sm:$0xff]
      %v676 = vld [vmem:[%s6 + $0x40] sm:$0xff]
      %v677 = vld [vmem:[%s6 + $0x48] sm:$0xff]
      %v678 = vld [vmem:[%s6 + $0x50] sm:$0xff]
      %v679 = vld [vmem:[%s6 + $0x58] sm:$0xff]
      %v680 = vld [vmem:[%s6 + $0x60] sm:$0xff]
      %v681 = vld [vmem:[%s6 + $0x68] sm:$0xff]
      %v682 = vld [vmem:[%s6 + $0x70] sm:$0xff]
      %v683 = vld [vmem:[%s6 + $0x78] sm:$0xff]
      %v684 = vld [vmem:[%s6 + $0x80] sm:$0xff]
      %v685 = vld [vmem:[%s6 + $0x88] sm:$0xff]
      %v686 = vld [vmem:[%s6 + $0x90] sm:$0xff]
      %v687 = vld [vmem:[%s6 + $0x98] sm:$0xff]
      %v688 = vld [vmem:[%s6 + $0xa0] sm:$0xff]
      %v689 = vld [vmem:[%s6 + $0xa8] sm:$0xff]
      %v690 = vld [vmem:[%s6 + $0xb0] sm:$0xff]
      %v691 = vld [vmem:[%s6 + $0xb8] sm:$0xff]
      %v692 = vld [vmem:[%s6 + $0xc0] sm:$0xff]
      %v693 = vld [vmem:[%s6 + $0xc8] sm:$0xff]
      %v694 = vld [vmem:[%s6 + $0xd0] sm:$0xff]
      %v695 = vld [vmem:[%s6 + $0xd8] sm:$0xff]
      %v696 = vld [vmem:[%s6 + $0xe0] sm:$0xff]
      %v697 = vld [vmem:[%s6 + $0xe8] sm:$0xff]
      %v698 = vld [vmem:[%s6 + $0xf0] sm:$0xff]
      %v699 = vld [vmem:[%s6 + $0xf8] sm:$0xff]
      %v700 = vld [vmem:[%s7] sm:$0x3]
      %v702 = vlaneseq
      %v703 = vshrl.u32 %v702, 7
      %v704 = vsub.s32 0, %v703
      %v705 = vrot.slane %v700, %v704
      %v706 = vlaneseq
      %v707 = vshrl.u32 %v706, 7
      %v708 = vsub.s32 1, %v707
      %v709 = vrot.slane %v700, %v708
      %712 = vmatprep.subr.mxu0 %v669
      %713 = vmatpush1.msra.mxu0 %v668
      %714 = vmatprep.subr.mxu0 %v671
      %715 = vmatpush1.msra.mxu0 %v670
      %716 = vmatprep.subr.mxu0 %v673
      %717 = vmatpush1.msra.mxu0 %v672
      %718 = vmatprep.subr.mxu0 %v675
      %719 = vmatpush1.msra.mxu0 %v674
      %720 = vmatprep.subr.mxu0 %v677
      %721 = vmatpush1.msra.mxu0 %v676
      %722 = vmatprep.subr.mxu0 %v679
      %723 = vmatpush1.msra.mxu0 %v678
      %724 = vmatprep.subr.mxu0 %v681
      %725 = vmatpush1.msra.mxu0 %v680
      %726 = vmatprep.subr.mxu0 %v683
      %727 = vmatpush1.msra.mxu0 %v682
      %728 = vmatprep.subr.mxu0 %v685
      %729 = vmatpush1.msra.mxu0 %v684
      %730 = vmatprep.subr.mxu0 %v687
      %731 = vmatpush1.msra.mxu0 %v686
      %732 = vmatprep.subr.mxu0 %v689
      %733 = vmatpush1.msra.mxu0 %v688
      %734 = vmatprep.subr.mxu0 %v691
      %735 = vmatpush1.msra.mxu0 %v690
      %736 = vmatprep.subr.mxu0 %v693
      %737 = vmatpush1.msra.mxu0 %v692
      %738 = vmatprep.subr.mxu0 %v695
      %739 = vmatpush1.msra.mxu0 %v694
      %740 = vmatprep.subr.mxu0 %v697
      %741 = vmatpush1.msra.mxu0 %v696
      %742 = vmatprep.subr.mxu0 %v699
      %743 = vmatpush1.msra.mxu0 %v698
      %744 = vmatprep.subr.mxu0 0.0
      %745 = vmatpush1.msra.mxu0 0.0
      %746 = vmatprep.subr.mxu0 0.0
      %747 = vmatpush1.msra.mxu0 0.0
      %748 = vmatprep.subr.mxu0 0.0
      %749 = vmatpush1.msra.mxu0 0.0
      %750 = vmatprep.subr.mxu0 0.0
      %751 = vmatpush1.msra.mxu0 0.0
      %752 = vmatprep.subr.mxu0 0.0
      %753 = vmatpush1.msra.mxu0 0.0
      %754 = vmatprep.subr.mxu0 0.0
      %755 = vmatpush1.msra.mxu0 0.0
      %756 = vmatprep.subr.mxu0 0.0
      %757 = vmatpush1.msra.mxu0 0.0
      %758 = vmatprep.subr.mxu0 0.0
      %759 = vmatpush1.msra.mxu0 0.0
      %760 = vmatprep.subr.mxu0 0.0
      %761 = vmatpush1.msra.mxu0 0.0
      %762 = vmatprep.subr.mxu0 0.0
      %763 = vmatpush1.msra.mxu0 0.0
      %764 = vmatprep.subr.mxu0 0.0
      %765 = vmatpush1.msra.mxu0 0.0
      %766 = vmatprep.subr.mxu0 0.0
      %767 = vmatpush1.msra.mxu0 0.0
      %768 = vmatprep.subr.mxu0 0.0
      %769 = vmatpush1.msra.mxu0 0.0
      %770 = vmatprep.subr.mxu0 0.0
      %771 = vmatpush1.msra.mxu0 0.0
      %772 = vmatprep.subr.mxu0 0.0
      %773 = vmatpush1.msra.mxu0 0.0
      %774 = vmatprep.subr.mxu0 0.0
      %775 = vmatpush1.msra.mxu0 0.0
      %776 = vmatprep.mubr.f32.mxu0 0.0
      %777 = vmatmul.mubr.f32.gmra.mrb[0].mxu0 %v667
      %v778 = vpop.f32.mrb[0].mxu0
      %v779 = vadd.f32 %v705, %v778
      %v780 = vpop.f32.mrb[0].mxu0
      %v781 = vadd.f32 %v709, %v780
      %782 = vdwg.mxu0
      %v783 = vlaneseq
      %v784 = vshrl.u32 %v783, 7
      %v785 = vld [vmem:[%s368] sm:$0xff]
      %v786 = vmul.u32 %v784, 32
      %v787 = vsub.s32 %v785, %v786
      %v788 = vcvt.s32.f32 %v787
      %v789 = vld [vmem:[%s8] sm:$0xff]
      %v790 = vld [vmem:[%s8 + $0x8] sm:$0xff]
      %v791 = vld [vmem:[%s8 + $0x10] sm:$0xff]
      %v792 = vld [vmem:[%s8 + $0x18] sm:$0xff]
      %v793 = vld [vmem:[%s8 + $0x20] sm:$0xff]
      %v794 = vld [vmem:[%s8 + $0x28] sm:$0xff]
      %v795 = vld [vmem:[%s8 + $0x30] sm:$0xff]
      %v796 = vld [vmem:[%s8 + $0x38] sm:$0xff]
      %v797 = vld [vmem:[%s8 + $0x40] sm:$0xff]
      %v798 = vld [vmem:[%s8 + $0x48] sm:$0xff]
      %v799 = vld [vmem:[%s8 + $0x50] sm:$0xff]
      %v800 = vld [vmem:[%s8 + $0x58] sm:$0xff]
      %v801 = vld [vmem:[%s8 + $0x60] sm:$0xff]
      %v802 = vld [vmem:[%s8 + $0x68] sm:$0xff]
      %v803 = vld [vmem:[%s8 + $0x70] sm:$0xff]
      %v804 = vld [vmem:[%s8 + $0x78] sm:$0xff]
      %vm805 = vcmask 523264
      %v807 = vsel %vm805, %v788, 0
      %809 = vmatprep.subr.mxu0 %v790
      %810 = vmatpush1.msra.mxu0 %v789
      %811 = vmatprep.subr.mxu0 %v792
      %812 = vmatpush1.msra.mxu0 %v791
      %813 = vmatprep.subr.mxu0 %v794
      %814 = vmatpush1.msra.mxu0 %v793
      %815 = vmatprep.subr.mxu0 %v796
      %816 = vmatpush1.msra.mxu0 %v795
      %817 = vmatprep.subr.mxu0 %v798
      %818 = vmatpush1.msra.mxu0 %v797
      %819 = vmatprep.subr.mxu0 %v800
      %820 = vmatpush1.msra.mxu0 %v799
      %821 = vmatprep.subr.mxu0 %v802
      %822 = vmatpush1.msra.mxu0 %v801
      %823 = vmatprep.subr.mxu0 %v804
      %824 = vmatpush1.msra.mxu0 %v803
      %825 = vmatprep.subr.mxu0 0.0
      %826 = vmatpush1.msra.mxu0 0.0
      %827 = vmatprep.subr.mxu0 0.0
      %828 = vmatpush1.msra.mxu0 0.0
      %829 = vmatprep.subr.mxu0 0.0
      %830 = vmatpush1.msra.mxu0 0.0
      %831 = vmatprep.subr.mxu0 0.0
      %832 = vmatpush1.msra.mxu0 0.0
      %833 = vmatprep.subr.mxu0 0.0
      %834 = vmatpush1.msra.mxu0 0.0
      %835 = vmatprep.subr.mxu0 0.0
      %836 = vmatpush1.msra.mxu0 0.0
      %837 = vmatprep.subr.mxu0 0.0
      %838 = vmatpush1.msra.mxu0 0.0
      %839 = vmatprep.subr.mxu0 0.0
      %840 = vmatpush1.msra.mxu0 0.0
      %841 = vmatprep.subr.mxu0 0.0
      %842 = vmatpush1.msra.mxu0 0.0
      %843 = vmatprep.subr.mxu0 0.0
      %844 = vmatpush1.msra.mxu0 0.0
      %845 = vmatprep.subr.mxu0 0.0
      %846 = vmatpush1.msra.mxu0 0.0
      %847 = vmatprep.subr.mxu0 0.0
      %848 = vmatpush1.msra.mxu0 0.0
      %849 = vmatprep.subr.mxu0 0.0
      %850 = vmatpush1.msra.mxu0 0.0
      %851 = vmatprep.subr.mxu0 0.0
      %852 = vmatpush1.msra.mxu0 0.0
      %853 = vmatprep.subr.mxu0 0.0
      %854 = vmatpush1.msra.mxu0 0.0
      %855 = vmatprep.subr.mxu0 0.0
      %856 = vmatpush1.msra.mxu0 0.0
      %857 = vmatprep.subr.mxu0 0.0
      %858 = vmatpush1.msra.mxu0 0.0
      %859 = vmatprep.subr.mxu0 0.0
      %860 = vmatpush1.msra.mxu0 0.0
      %861 = vmatprep.subr.mxu0 0.0
      %862 = vmatpush1.msra.mxu0 0.0
      %863 = vmatprep.subr.mxu0 0.0
      %864 = vmatpush1.msra.mxu0 0.0
      %865 = vmatprep.subr.mxu0 0.0
      %866 = vmatpush1.msra.mxu0 0.0
      %867 = vmatprep.subr.mxu0 0.0
      %868 = vmatpush1.msra.mxu0 0.0
      %869 = vmatprep.subr.mxu0 0.0
      %870 = vmatpush1.msra.mxu0 0.0
      %871 = vmatprep.subr.mxu0 0.0
      %872 = vmatpush1.msra.mxu0 0.0
      %873 = vmatprep.mubr.f32.mxu0 0.0
      %874 = vmatmul.mubr.f32.gmra.mrb[0].mxu0 %v807
      %v875 = vpop.f32.mrb[0].mxu0
      %v876 = vadd.f32 0.0, %v875
      %v877 = vpop.f32.mrb[0].mxu0
      %v878 = vadd.f32 0.0, %v877
      %879 = vdwg.mxu0
      %v880 = vld [vmem:[%s9] sm:$0x3]
      %v882 = vlaneseq
      %v883 = vshrl.u32 %v882, 7
      %v884 = vsub.s32 0, %v883
      %v885 = vrot.slane %v880, %v884
      %v886 = vlaneseq
      %v887 = vshrl.u32 %v886, 7
      %v888 = vsub.s32 1, %v887
      %v889 = vrot.slane %v880, %v888
      %v892 = vsub.f32 %v876, %v885
      %v893 = vsub.f32 %v878, %v889
      %v894 = vand.u32 2147483647, %v892
      %v895 = vand.u32 2147483647, %v893
      %vm896 = vcmp.lt.f32.partialorder %v894, 0.5
      %vm897 = vcmp.lt.f32.partialorder %v895, 0.5
      %v898 = vsel %vm896, %v507, 0.0
      %v899 = vsel %vm897, %v509, 0.0
      %v900 = vadd.f32 %v898, %v779
      %v901 = vadd.f32 %v899, %v781
      %v902 = vmax.f32 %v900, 0.0
      %v903 = vmax.f32 %v901, 0.0
      %904 = vst [vmem:[%s373] sm:$0xff] %v902
      %905 = vst [vmem:[%s373 + $0x8] sm:$0xff] %v903
      %p906 = scmp.lt.s32.totalorder %s21, 1
      %s907 = scalar_select %p906, %s21, 1
      %s908 = smul.addr %s907, 2
      %s909 = smul.addr %s908, 8
      %s910 = scalar_lea.vmem %s10, %s909
      // Predicated region
      $region61: #{upsampling_bottleneck.1} parent=59 // pred_check
        %p911 = pneg %p259
      $region62: #{upsampling_bottleneck.1} parent=59 // pred_check_branch
        %913 = sbr.rel (%p911) target = $region64
      $region63: #{upsampling_bottleneck.1} parent=59 // pred_region
        _
      $region64: #{upsampling_bottleneck.1} parent=59 // pred_fallthru
        _
    $region60: #{upsampling_bottleneck.1} parent=5 // pred_fallthru
      _
    %p914 = scmp.le.s32.totalorder 2, %s16
    // Predicated region
    $region65: #{upsampling_bottleneck.1} parent=5 // pred_check
      %p915 = pneg %p914
    $region66: #{upsampling_bottleneck.1} parent=5 // pred_check_branch
      %917 = sbr.rel (%p915) target = $region68
    $region67: #{upsampling_bottleneck.1} parent=5 // pred_region
      %s918 = ssub.s32 %s16, 2
      // Predicated region
      $region69: #{upsampling_bottleneck.1} parent=67 // pred_check
        %p919 = pneg %p265
      $region70: #{upsampling_bottleneck.1} parent=67 // pred_check_branch
        %921 = sbr.rel (%p919) target = $region72
      $region71: #{upsampling_bottleneck.1} parent=67 // pred_region
        %p922 = scmp.lt.s32.totalorder %s22, 1
        %s923 = scalar_select %p922, %s22, 1
        %s924 = smul.addr %s923, 2
        %s925 = smul.addr %s924, 8
        %s926 = scalar_lea.vmem %s10, %s925
      $region72: #{upsampling_bottleneck.1} parent=67 // pred_fallthru
        _
    $region68: #{upsampling_bottleneck.1} parent=5 // pred_fallthru
      _
  $region6: #{upsampling_bottleneck.1} parent=0 // loop_footer
    %s20 = sadd.s32 1, %s16
  $region7: #{upsampling_bottleneck.1} parent=0 // loop_footer_branch
    %15 = sbr.rel target = $region3
  $region8: #{upsampling_bottleneck.1} parent=0 // loop_exit
    _

</llo_original>
